<compile_context>
chip_gen: v7x
topology: tpu7x:2x2x1
jax: 0.10.0
libtpu: 0.0.40
codegen_flags: <defaults>
</compile_context>

<pallas_src>
import functools

import jax
import jax.numpy as jnp
import numpy as np
from jax import lax
from jax.experimental import pallas as pl
from jax.experimental.pallas import tpu as pltpu


def _basic_block1_kernel(x_ref, w1_ref, b1_ref, w2_ref, b2_ref, mask_ref,
                         out_ref, *, H, W):
    # x_ref   : (Bt, Cp, P)  input slab (also the residual), P = H*W
    # w*_ref  : (Cp, 9*Cp)   tap-major weights, column = (kh*3+kw)*Cp + cin
    # b*_ref  : (Cp, 1)
    # mask_ref: (9, Cp, Bt*P) static zero-padding masks (1.0 = in-bounds src)
    # out_ref : (Bt, Cp, P)
    Bt, Cp, P = x_ref.shape
    N = Bt * P

    # Fold the Bt images of this grid step into the lane (N) axis.
    if Bt == 1:
        x = x_ref[0]                                            # (Cp, P)
    else:
        x = jnp.concatenate([x_ref[b] for b in range(Bt)], axis=-1)  # (Cp, N)

    # Flat-index source offsets of the 9 taps of a 3x3 "same" convolution.
    offs = [(kh - 1) * W + (kw - 1) for kh in range(3) for kw in range(3)]

    def shifted_taps(a):
        """(Cp, N) -> (9*Cp, N): 9 lane-rotated, boundary-masked copies."""
        pieces = []
        for t, off in enumerate(offs):
            if off == 0:                       # center tap: no shift, no mask
                s = a
            else:
                # result[:, p] = a[:, (p + off) mod N]  (XLU lane rotate);
                # every wrapped / out-of-image source is zeroed by the mask.
                s = pltpu.roll(a, (-off) % N, 1)
                s = s * mask_ref[t]            # (Cp, N) aligned tile, VPU mul
            pieces.append(s)
        return jnp.concatenate(pieces, axis=0)  # sublane-aligned 8-row pieces

    # conv1 + bias + relu : single MXU matmul, M=Cp, K=9*Cp, N=Bt*P
    h1 = jnp.dot(w1_ref[...], shifted_taps(x),
                 preferred_element_type=jnp.float32)
    h1 = jnp.maximum(h1 + b1_ref[...], 0.0)

    # conv2 + bias + relu + residual
    h2 = jnp.dot(w2_ref[...], shifted_taps(h1),
                 preferred_element_type=jnp.float32)
    h2 = jnp.maximum(h2 + b2_ref[...], 0.0)

    y = (h2 + x).astype(out_ref.dtype)
    for b in range(Bt):                        # lane-aligned slice stores
        out_ref[b] = y[:, b * P:(b + 1) * P]


def _grid_steps(B):
    """1 grid step on single-TC chips (v5e/v6e), up to 2 parallel on v7x."""
    n_tc = 1
    try:
        kind = jax.devices()[0].device_kind.lower()
        if "v7" in kind:
            n_tc = 2
    except Exception:
        pass
    g = max(1, min(B, n_tc))
    while B % g != 0:
        g -= 1
    return g


def basic_block1(x_nchw, w1, b1, w2, b2):
    """Forward pass of BasicBlock1.

    x_nchw: (B, C, H, W) float32
    w1, w2: (Cout, Cin, 3, 3) float32   (PyTorch conv weight layout)
    b1, b2: (C,) float32
    returns (B, C, H, W) float32
    """
    B, C, H, W = x_nchw.shape
    P = H * W
    Cp = ((C + 7) // 8) * 8                     # pad channels to sublane granule
    pad_c = Cp - C

    G = _grid_steps(B)                          # grid steps
    Bt = B // G                                 # images folded per step
    N = Bt * P

    # ---- inputs: free reshape + zero-pad channels (no transposes of x) ----
    x_flat = x_nchw.reshape(B, C, P).astype(jnp.float32)
    if pad_c:
        x_flat = jnp.pad(x_flat, ((0, 0), (0, pad_c), (0, 0)))

    def prep_w(w):
        # (Cout, Cin, kh, kw) -> (Cout, kh, kw, Cin), pad both channel axes,
        # flatten to tap-major (Cp, 9*Cp).
        wt = jnp.transpose(w, (0, 2, 3, 1)).astype(jnp.float32)
        if pad_c:
            wt = jnp.pad(wt, ((0, pad_c), (0, 0), (0, 0), (0, pad_c)))
        return wt.reshape(Cp, 9 * Cp)

    w1m, w2m = prep_w(w1), prep_w(w2)
    b1m = jnp.pad(b1.astype(jnp.float32), (0, pad_c)).reshape(Cp, 1)
    b2m = jnp.pad(b2.astype(jnp.float32), (0, pad_c)).reshape(Cp, 1)

    # ---- static zero-padding masks (trace-time constants) ----
    rows = np.arange(H).reshape(H, 1)
    cols = np.arange(W).reshape(1, W)
    masks_np = np.empty((9, Cp, N), np.float32)
    for kh in range(3):
        for kw in range(3):
            dy, dx = kh - 1, kw - 1
            valid = ((rows + dy >= 0) & (rows + dy < H) &
                     (cols + dx >= 0) & (cols + dx < W))
            m = np.tile(valid.astype(np.float32).reshape(P), Bt)      # (N,)
            masks_np[kh * 3 + kw] = np.broadcast_to(m, (Cp, N))
    masks = jnp.asarray(masks_np)

    grid_spec = pltpu.PrefetchScalarGridSpec(
        num_scalar_prefetch=0,
        grid=(G,),
        in_specs=[
            pl.BlockSpec((Bt, Cp, P), lambda g: (g, 0, 0)),
            pl.BlockSpec((Cp, 9 * Cp), lambda g: (0, 0)),
            pl.BlockSpec((Cp, 1), lambda g: (0, 0)),
            pl.BlockSpec((Cp, 9 * Cp), lambda g: (0, 0)),
            pl.BlockSpec((Cp, 1), lambda g: (0, 0)),
            pl.BlockSpec((9, Cp, N), lambda g: (0, 0, 0)),
        ],
        out_specs=pl.BlockSpec((Bt, Cp, P), lambda g: (g, 0, 0)),
    )

    out_flat = pl.pallas_call(
        functools.partial(_basic_block1_kernel, H=H, W=W),
        out_shape=jax.ShapeDtypeStruct((B, Cp, P), jnp.float32),
        grid_spec=grid_spec,
        compiler_params=pltpu.CompilerParams(
            dimension_semantics=("parallel",)),
    )(x_flat, w1m, b1m, w2m, b2m, masks)

    return out_flat[:, :C, :].reshape(B, C, H, W)


def _reference(x_nchw, w1, b1, w2, b2):
    """Pure-JAX reference matching the PyTorch forward (NCHW conv)."""
    dn = ("NCHW", "OIHW", "NCHW")
    out = lax.conv_general_dilated(x_nchw, w1, (1, 1), ((1, 1), (1, 1)),
                                   dimension_numbers=dn)
    out = jax.nn.relu(out + b1.reshape(1, -1, 1, 1))
    out = lax.conv_general_dilated(out, w2, (1, 1), ((1, 1), (1, 1)),
                                   dimension_numbers=dn)
    out = jax.nn.relu(out + b2.reshape(1, -1, 1, 1))
    return out + x_nchw


if __name__ == "__main__":
    B, C, H, W = 2, 4, 16, 16  # planes = 4
    key = jax.random.PRNGKey(0)
    kx, kw1, kw2 = jax.random.split(key, 3)

    x = jax.random.normal(kx, (B, C, H, W), dtype=jnp.float32)
    # nn.init.normal_(weight, mean=0, std=0.01); nn.init.constant_(bias, 0)
    w1 = 0.01 * jax.random.normal(kw1, (C, C, 3, 3), dtype=jnp.float32)
    w2 = 0.01 * jax.random.normal(kw2, (C, C, 3, 3), dtype=jnp.float32)
    b1 = jnp.zeros((C,), dtype=jnp.float32)
    b2 = jnp.zeros((C,), dtype=jnp.float32)

    out = basic_block1(x, w1, b1, w2, b2)
    out = jax.block_until_ready(out)

    ref = jax.block_until_ready(_reference(x, w1, b1, w2, b2))
    np.testing.assert_allclose(np.asarray(out), np.asarray(ref),
                               rtol=1e-5, atol=1e-5)
    print("KERNEL_OK")
</pallas_src>

<mosaic_0001>
module attributes {stable_mosaic.version = 11 : i64} {
  func.func @_basic_block1_kernel(%arg0: i32, %arg1: memref<2x8x256xf32, #tpu.memory_space<vmem>>, %arg2: memref<8x72xf32, #tpu.memory_space<vmem>>, %arg3: memref<8x1xf32, #tpu.memory_space<vmem>>, %arg4: memref<8x72xf32, #tpu.memory_space<vmem>>, %arg5: memref<8x1xf32, #tpu.memory_space<vmem>>, %arg6: memref<9x8x512xf32, #tpu.memory_space<vmem>>, %arg7: memref<2x8x256xf32, #tpu.memory_space<vmem>>) attributes {dimension_semantics = [#tpu.dimension_semantics<parallel>], iteration_bounds = array<i64: 1>, scalar_prefetch = 0 : i64, scratch_operands = 0 : i64, tpu.core_type = #tpu.core_type<tc>, window_params = [{transform_indices = @transform_0, window_bounds = array<i64: 2, 8, 256>}, {pipeline_mode = #tpu.pipeline_mode<synchronous>, transform_indices = @transform_1, window_bounds = array<i64: 8, 72>}, {pipeline_mode = #tpu.pipeline_mode<synchronous>, transform_indices = @transform_2, window_bounds = array<i64: 8, 1>}, {pipeline_mode = #tpu.pipeline_mode<synchronous>, transform_indices = @transform_3, window_bounds = array<i64: 8, 72>}, {pipeline_mode = #tpu.pipeline_mode<synchronous>, transform_indices = @transform_4, window_bounds = array<i64: 8, 1>}, {pipeline_mode = #tpu.pipeline_mode<synchronous>, transform_indices = @transform_5, window_bounds = array<i64: 9, 8, 512>}, {transform_indices = @transform_6, window_bounds = array<i64: 2, 8, 256>}]} {
    %c0 = arith.constant 0 : index
    %c0_0 = arith.constant 0 : index
    %c0_1 = arith.constant 0 : index
    %0 = vector.load %arg1[%c0, %c0_0, %c0_1] : memref<2x8x256xf32, #tpu.memory_space<vmem>>, vector<1x8x256xf32>
    %1 = vector.shape_cast %0 : vector<1x8x256xf32> to vector<8x256xf32>
    %c1 = arith.constant 1 : index
    %c0_2 = arith.constant 0 : index
    %c0_3 = arith.constant 0 : index
    %2 = vector.load %arg1[%c1, %c0_2, %c0_3] : memref<2x8x256xf32, #tpu.memory_space<vmem>>, vector<1x8x256xf32>
    %3 = vector.shape_cast %2 : vector<1x8x256xf32> to vector<8x256xf32>
    %4 = tpu.concatenate %1, %3 in 1 : vector<8x256xf32>, vector<8x256xf32> -> vector<8x512xf32>
    %c0_4 = arith.constant 0 : index
    %c0_5 = arith.constant 0 : index
    %5 = vector.load %arg2[%c0_4, %c0_5] : memref<8x72xf32, #tpu.memory_space<vmem>>, vector<8x72xf32>
    %c17_i32 = arith.constant 17 : i32
    %6 = tpu.dynamic_rotate %4 by %c17_i32 dim 1 : vector<8x512xf32>, i32 -> vector<8x512xf32>
    %c0_6 = arith.constant 0 : index
    %c0_7 = arith.constant 0 : index
    %c0_8 = arith.constant 0 : index
    %7 = vector.load %arg6[%c0_6, %c0_7, %c0_8] : memref<9x8x512xf32, #tpu.memory_space<vmem>>, vector<1x8x512xf32>
    %8 = vector.shape_cast %7 : vector<1x8x512xf32> to vector<8x512xf32>
    %9 = arith.mulf %6, %8 : vector<8x512xf32>
    %c16_i32 = arith.constant 16 : i32
    %10 = tpu.dynamic_rotate %4 by %c16_i32 dim 1 : vector<8x512xf32>, i32 -> vector<8x512xf32>
    %c1_9 = arith.constant 1 : index
    %c0_10 = arith.constant 0 : index
    %c0_11 = arith.constant 0 : index
    %11 = vector.load %arg6[%c1_9, %c0_10, %c0_11] : memref<9x8x512xf32, #tpu.memory_space<vmem>>, vector<1x8x512xf32>
    %12 = vector.shape_cast %11 : vector<1x8x512xf32> to vector<8x512xf32>
    %13 = arith.mulf %10, %12 : vector<8x512xf32>
    %c15_i32 = arith.constant 15 : i32
    %14 = tpu.dynamic_rotate %4 by %c15_i32 dim 1 : vector<8x512xf32>, i32 -> vector<8x512xf32>
    %c2 = arith.constant 2 : index
    %c0_12 = arith.constant 0 : index
    %c0_13 = arith.constant 0 : index
    %15 = vector.load %arg6[%c2, %c0_12, %c0_13] : memref<9x8x512xf32, #tpu.memory_space<vmem>>, vector<1x8x512xf32>
    %16 = vector.shape_cast %15 : vector<1x8x512xf32> to vector<8x512xf32>
    %17 = arith.mulf %14, %16 : vector<8x512xf32>
    %c1_i32 = arith.constant 1 : i32
    %18 = tpu.dynamic_rotate %4 by %c1_i32 dim 1 : vector<8x512xf32>, i32 -> vector<8x512xf32>
    %c3 = arith.constant 3 : index
    %c0_14 = arith.constant 0 : index
    %c0_15 = arith.constant 0 : index
    %19 = vector.load %arg6[%c3, %c0_14, %c0_15] : memref<9x8x512xf32, #tpu.memory_space<vmem>>, vector<1x8x512xf32>
    %20 = vector.shape_cast %19 : vector<1x8x512xf32> to vector<8x512xf32>
    %21 = arith.mulf %18, %20 : vector<8x512xf32>
    %c511_i32 = arith.constant 511 : i32
    %22 = tpu.dynamic_rotate %4 by %c511_i32 dim 1 : vector<8x512xf32>, i32 -> vector<8x512xf32>
    %c5 = arith.constant 5 : index
    %c0_16 = arith.constant 0 : index
    %c0_17 = arith.constant 0 : index
    %23 = vector.load %arg6[%c5, %c0_16, %c0_17] : memref<9x8x512xf32, #tpu.memory_space<vmem>>, vector<1x8x512xf32>
    %24 = vector.shape_cast %23 : vector<1x8x512xf32> to vector<8x512xf32>
    %25 = arith.mulf %22, %24 : vector<8x512xf32>
    %c497_i32 = arith.constant 497 : i32
    %26 = tpu.dynamic_rotate %4 by %c497_i32 dim 1 : vector<8x512xf32>, i32 -> vector<8x512xf32>
    %c6 = arith.constant 6 : index
    %c0_18 = arith.constant 0 : index
    %c0_19 = arith.constant 0 : index
    %27 = vector.load %arg6[%c6, %c0_18, %c0_19] : memref<9x8x512xf32, #tpu.memory_space<vmem>>, vector<1x8x512xf32>
    %28 = vector.shape_cast %27 : vector<1x8x512xf32> to vector<8x512xf32>
    %29 = arith.mulf %26, %28 : vector<8x512xf32>
    %c496_i32 = arith.constant 496 : i32
    %30 = tpu.dynamic_rotate %4 by %c496_i32 dim 1 : vector<8x512xf32>, i32 -> vector<8x512xf32>
    %c7 = arith.constant 7 : index
    %c0_20 = arith.constant 0 : index
    %c0_21 = arith.constant 0 : index
    %31 = vector.load %arg6[%c7, %c0_20, %c0_21] : memref<9x8x512xf32, #tpu.memory_space<vmem>>, vector<1x8x512xf32>
    %32 = vector.shape_cast %31 : vector<1x8x512xf32> to vector<8x512xf32>
    %33 = arith.mulf %30, %32 : vector<8x512xf32>
    %c495_i32 = arith.constant 495 : i32
    %34 = tpu.dynamic_rotate %4 by %c495_i32 dim 1 : vector<8x512xf32>, i32 -> vector<8x512xf32>
    %c8 = arith.constant 8 : index
    %c0_22 = arith.constant 0 : index
    %c0_23 = arith.constant 0 : index
    %35 = vector.load %arg6[%c8, %c0_22, %c0_23] : memref<9x8x512xf32, #tpu.memory_space<vmem>>, vector<1x8x512xf32>
    %36 = vector.shape_cast %35 : vector<1x8x512xf32> to vector<8x512xf32>
    %37 = arith.mulf %34, %36 : vector<8x512xf32>
    %38 = tpu.concatenate %9, %13, %17, %21, %4, %25, %29, %33, %37 in 0 : vector<8x512xf32>, vector<8x512xf32>, vector<8x512xf32>, vector<8x512xf32>, vector<8x512xf32>, vector<8x512xf32>, vector<8x512xf32>, vector<8x512xf32>, vector<8x512xf32> -> vector<72x512xf32>
    %cst = arith.constant dense<0.000000e+00> : vector<8x512xf32>
    %39 = tpu.matmul %5, %38, %cst {dimension_numbers = #tpu.dot_dimension_numbers<[1], [0], [0], [1], [0, 0, 1, 1], [], []>} : vector<8x72xf32>, vector<72x512xf32>, vector<8x512xf32> -> vector<8x512xf32>
    %c0_24 = arith.constant 0 : index
    %c0_25 = arith.constant 0 : index
    %40 = vector.load %arg3[%c0_24, %c0_25] : memref<8x1xf32, #tpu.memory_space<vmem>>, vector<8x1xf32>
    %41 = vector.broadcast %40 : vector<8x1xf32> to vector<8x512xf32>
    %42 = arith.addf %39, %41 : vector<8x512xf32>
    %cst_26 = arith.constant 0.000000e+00 : f32
    %43 = vector.broadcast %cst_26 : f32 to vector<8x512xf32>
    %44 = arith.maximumf %42, %43 : vector<8x512xf32>
    %c0_27 = arith.constant 0 : index
    %c0_28 = arith.constant 0 : index
    %45 = vector.load %arg4[%c0_27, %c0_28] : memref<8x72xf32, #tpu.memory_space<vmem>>, vector<8x72xf32>
    %c17_i32_29 = arith.constant 17 : i32
    %46 = tpu.dynamic_rotate %44 by %c17_i32_29 dim 1 : vector<8x512xf32>, i32 -> vector<8x512xf32>
    %c0_30 = arith.constant 0 : index
    %c0_31 = arith.constant 0 : index
    %c0_32 = arith.constant 0 : index
    %47 = vector.load %arg6[%c0_30, %c0_31, %c0_32] : memref<9x8x512xf32, #tpu.memory_space<vmem>>, vector<1x8x512xf32>
    %48 = vector.shape_cast %47 : vector<1x8x512xf32> to vector<8x512xf32>
    %49 = arith.mulf %46, %48 : vector<8x512xf32>
    %c16_i32_33 = arith.constant 16 : i32
    %50 = tpu.dynamic_rotate %44 by %c16_i32_33 dim 1 : vector<8x512xf32>, i32 -> vector<8x512xf32>
    %c1_34 = arith.constant 1 : index
    %c0_35 = arith.constant 0 : index
    %c0_36 = arith.constant 0 : index
    %51 = vector.load %arg6[%c1_34, %c0_35, %c0_36] : memref<9x8x512xf32, #tpu.memory_space<vmem>>, vector<1x8x512xf32>
    %52 = vector.shape_cast %51 : vector<1x8x512xf32> to vector<8x512xf32>
    %53 = arith.mulf %50, %52 : vector<8x512xf32>
    %c15_i32_37 = arith.constant 15 : i32
    %54 = tpu.dynamic_rotate %44 by %c15_i32_37 dim 1 : vector<8x512xf32>, i32 -> vector<8x512xf32>
    %c2_38 = arith.constant 2 : index
    %c0_39 = arith.constant 0 : index
    %c0_40 = arith.constant 0 : index
    %55 = vector.load %arg6[%c2_38, %c0_39, %c0_40] : memref<9x8x512xf32, #tpu.memory_space<vmem>>, vector<1x8x512xf32>
    %56 = vector.shape_cast %55 : vector<1x8x512xf32> to vector<8x512xf32>
    %57 = arith.mulf %54, %56 : vector<8x512xf32>
    %c1_i32_41 = arith.constant 1 : i32
    %58 = tpu.dynamic_rotate %44 by %c1_i32_41 dim 1 : vector<8x512xf32>, i32 -> vector<8x512xf32>
    %c3_42 = arith.constant 3 : index
    %c0_43 = arith.constant 0 : index
    %c0_44 = arith.constant 0 : index
    %59 = vector.load %arg6[%c3_42, %c0_43, %c0_44] : memref<9x8x512xf32, #tpu.memory_space<vmem>>, vector<1x8x512xf32>
    %60 = vector.shape_cast %59 : vector<1x8x512xf32> to vector<8x512xf32>
    %61 = arith.mulf %58, %60 : vector<8x512xf32>
    %c511_i32_45 = arith.constant 511 : i32
    %62 = tpu.dynamic_rotate %44 by %c511_i32_45 dim 1 : vector<8x512xf32>, i32 -> vector<8x512xf32>
    %c5_46 = arith.constant 5 : index
    %c0_47 = arith.constant 0 : index
    %c0_48 = arith.constant 0 : index
    %63 = vector.load %arg6[%c5_46, %c0_47, %c0_48] : memref<9x8x512xf32, #tpu.memory_space<vmem>>, vector<1x8x512xf32>
    %64 = vector.shape_cast %63 : vector<1x8x512xf32> to vector<8x512xf32>
    %65 = arith.mulf %62, %64 : vector<8x512xf32>
    %c497_i32_49 = arith.constant 497 : i32
    %66 = tpu.dynamic_rotate %44 by %c497_i32_49 dim 1 : vector<8x512xf32>, i32 -> vector<8x512xf32>
    %c6_50 = arith.constant 6 : index
    %c0_51 = arith.constant 0 : index
    %c0_52 = arith.constant 0 : index
    %67 = vector.load %arg6[%c6_50, %c0_51, %c0_52] : memref<9x8x512xf32, #tpu.memory_space<vmem>>, vector<1x8x512xf32>
    %68 = vector.shape_cast %67 : vector<1x8x512xf32> to vector<8x512xf32>
    %69 = arith.mulf %66, %68 : vector<8x512xf32>
    %c496_i32_53 = arith.constant 496 : i32
    %70 = tpu.dynamic_rotate %44 by %c496_i32_53 dim 1 : vector<8x512xf32>, i32 -> vector<8x512xf32>
    %c7_54 = arith.constant 7 : index
    %c0_55 = arith.constant 0 : index
    %c0_56 = arith.constant 0 : index
    %71 = vector.load %arg6[%c7_54, %c0_55, %c0_56] : memref<9x8x512xf32, #tpu.memory_space<vmem>>, vector<1x8x512xf32>
    %72 = vector.shape_cast %71 : vector<1x8x512xf32> to vector<8x512xf32>
    %73 = arith.mulf %70, %72 : vector<8x512xf32>
    %c495_i32_57 = arith.constant 495 : i32
    %74 = tpu.dynamic_rotate %44 by %c495_i32_57 dim 1 : vector<8x512xf32>, i32 -> vector<8x512xf32>
    %c8_58 = arith.constant 8 : index
    %c0_59 = arith.constant 0 : index
    %c0_60 = arith.constant 0 : index
    %75 = vector.load %arg6[%c8_58, %c0_59, %c0_60] : memref<9x8x512xf32, #tpu.memory_space<vmem>>, vector<1x8x512xf32>
    %76 = vector.shape_cast %75 : vector<1x8x512xf32> to vector<8x512xf32>
    %77 = arith.mulf %74, %76 : vector<8x512xf32>
    %78 = tpu.concatenate %49, %53, %57, %61, %44, %65, %69, %73, %77 in 0 : vector<8x512xf32>, vector<8x512xf32>, vector<8x512xf32>, vector<8x512xf32>, vector<8x512xf32>, vector<8x512xf32>, vector<8x512xf32>, vector<8x512xf32>, vector<8x512xf32> -> vector<72x512xf32>
    %cst_61 = arith.constant dense<0.000000e+00> : vector<8x512xf32>
    %79 = tpu.matmul %45, %78, %cst_61 {dimension_numbers = #tpu.dot_dimension_numbers<[1], [0], [0], [1], [0, 0, 1, 1], [], []>} : vector<8x72xf32>, vector<72x512xf32>, vector<8x512xf32> -> vector<8x512xf32>
    %c0_62 = arith.constant 0 : index
    %c0_63 = arith.constant 0 : index
    %80 = vector.load %arg5[%c0_62, %c0_63] : memref<8x1xf32, #tpu.memory_space<vmem>>, vector<8x1xf32>
    %81 = vector.broadcast %80 : vector<8x1xf32> to vector<8x512xf32>
    %82 = arith.addf %79, %81 : vector<8x512xf32>
    %cst_64 = arith.constant 0.000000e+00 : f32
    %83 = vector.broadcast %cst_64 : f32 to vector<8x512xf32>
    %84 = arith.maximumf %82, %83 : vector<8x512xf32>
    %85 = arith.addf %84, %4 : vector<8x512xf32>
    %86 = vector.extract_strided_slice %85 {offsets = [0, 0], sizes = [8, 256], strides = [1, 1]} : vector<8x512xf32> to vector<8x256xf32>
    %c0_65 = arith.constant 0 : index
    %c0_66 = arith.constant 0 : index
    %c0_67 = arith.constant 0 : index
    %87 = vector.load %arg7[%c0_65, %c0_66, %c0_67] : memref<2x8x256xf32, #tpu.memory_space<vmem>>, vector<1x8x256xf32>
    %88 = vector.shape_cast %87 : vector<1x8x256xf32> to vector<8x256xf32>
    %89 = vector.shape_cast %86 : vector<8x256xf32> to vector<1x8x256xf32>
    tpu.vector_store %arg7[%c0_65, %c0_66, %c0_67], %89 {strides = array<i32>} : memref<2x8x256xf32, #tpu.memory_space<vmem>>, vector<1x8x256xf32>,
    %90 = vector.extract_strided_slice %85 {offsets = [0, 256], sizes = [8, 256], strides = [1, 1]} : vector<8x512xf32> to vector<8x256xf32>
    %c1_68 = arith.constant 1 : index
    %c0_69 = arith.constant 0 : index
    %c0_70 = arith.constant 0 : index
    %91 = vector.load %arg7[%c1_68, %c0_69, %c0_70] : memref<2x8x256xf32, #tpu.memory_space<vmem>>, vector<1x8x256xf32>
    %92 = vector.shape_cast %91 : vector<1x8x256xf32> to vector<8x256xf32>
    %93 = vector.shape_cast %90 : vector<8x256xf32> to vector<1x8x256xf32>
    tpu.vector_store %arg7[%c1_68, %c0_69, %c0_70], %93 {strides = array<i32>} : memref<2x8x256xf32, #tpu.memory_space<vmem>>, vector<1x8x256xf32>,
    return
  }
  func.func @transform_0(%arg0: i32) -> (i32, i32, i32) {
    %c0_i32 = arith.constant 0 : i32
    %c0_i32_0 = arith.constant 0 : i32
    %c0_i32_1 = arith.constant 0 : i32
    return %arg0, %c0_i32, %c0_i32_0 : i32, i32, i32
  }
  func.func @transform_1(%arg0: i32) -> (i32, i32) {
    %c0_i32 = arith.constant 0 : i32
    %c0_i32_0 = arith.constant 0 : i32
    %c0_i32_1 = arith.constant 0 : i32
    return %c0_i32, %c0_i32_0 : i32, i32
  }
  func.func @transform_2(%arg0: i32) -> (i32, i32) {
    %c0_i32 = arith.constant 0 : i32
    %c0_i32_0 = arith.constant 0 : i32
    %c0_i32_1 = arith.constant 0 : i32
    return %c0_i32, %c0_i32_0 : i32, i32
  }
  func.func @transform_3(%arg0: i32) -> (i32, i32) {
    %c0_i32 = arith.constant 0 : i32
    %c0_i32_0 = arith.constant 0 : i32
    %c0_i32_1 = arith.constant 0 : i32
    return %c0_i32, %c0_i32_0 : i32, i32
  }
  func.func @transform_4(%arg0: i32) -> (i32, i32) {
    %c0_i32 = arith.constant 0 : i32
    %c0_i32_0 = arith.constant 0 : i32
    %c0_i32_1 = arith.constant 0 : i32
    return %c0_i32, %c0_i32_0 : i32, i32
  }
  func.func @transform_5(%arg0: i32) -> (i32, i32, i32) {
    %c0_i32 = arith.constant 0 : i32
    %c0_i32_0 = arith.constant 0 : i32
    %c0_i32_1 = arith.constant 0 : i32
    %c0_i32_2 = arith.constant 0 : i32
    return %c0_i32, %c0_i32_0, %c0_i32_1 : i32, i32, i32
  }
  func.func @transform_6(%arg0: i32) -> (i32, i32, i32) {
    %c0_i32 = arith.constant 0 : i32
    %c0_i32_0 = arith.constant 0 : i32
    %c0_i32_1 = arith.constant 0 : i32
    return %arg0, %c0_i32, %c0_i32_0 : i32, i32, i32
  }
}

</mosaic_0001>

<llo_original>
// kernel: tpu_custom_call.1
$region0: #{tpu_custom_call.1}
  #allocation0 [shape = 'u32[]', space=smem, size = 0x4, offset = 0x4, fixed_abs, tag = 'smem constant byte address 0x4 - core index']
  #allocation1 [shape = 'u32[144,128]{1,0:T(1,128)}', space=vmem, size = 0x12000, scoped, tag = 'internal scratch']
  %s0 = inlined_call_operand.hbm [shape: f32[2,8,256], index: 0, kind: input, shape index: {}]
  %s1 = inlined_call_operand.vmem [shape: f32[8,72], index: 1, kind: input, shape index: {}]
  %s2 = inlined_call_operand.vmem [shape: f32[8,1], index: 2, kind: input, shape index: {}]
  %s3 = inlined_call_operand.vmem [shape: f32[8,72], index: 3, kind: input, shape index: {}]
  %s4 = inlined_call_operand.vmem [shape: f32[8,1], index: 4, kind: input, shape index: {}]
  %s5 = inlined_call_operand.hbm [shape: f32[9,8,512], index: 5, kind: input, shape index: {}]
  %s6 = inlined_call_operand.hbm [shape: f32[2,8,256], index: 6, kind: output, shape index: {}]
  %s7 = sld [smem:[#allocation0]]
  $region42: #{tpu_custom_call.1} parent=0
    _
  %s9 = ssub.s32 1, %s7
  %s10 = scalar_select 0, %s9, %s7
  $region1: #{tpu_custom_call.1} parent=0
    #allocation2 [shape = 'u8[16384]{0}', space=vmem, size = 0x4000, scoped, tag = 'input window, operand 0, single buffered']
    #allocation3 [shape = 's32[1]{0}', space=sflag, size = 0x4, scoped, tag = 'scoped memory for tpu_custom_call.1']
    #allocation4 [shape = 's32[1]{0}', space=sflag, size = 0x4, scoped, tag = 'scoped memory for tpu_custom_call.1']
    #allocation5 [shape = 'u8[147456]{0}', space=vmem, size = 0x24000, scoped, tag = 'input window, operand 5, single buffered']
    #allocation6 [shape = 's32[1]{0}', space=sflag, size = 0x4, scoped, tag = 'scoped memory for tpu_custom_call.1']
    #allocation7 [shape = 'u8[16384]{0}', space=vmem, size = 0x4000, scoped, tag = 'output window, operand 0, single buffered']
    %11 = vsyncpa [#allocation3], 0
    %12 = vsyncpa [#allocation6], 0
    %13 = vsyncpa [#allocation4], 0
    // Predicated region
    $region2: #{tpu_custom_call.1} parent=1 // pred_check
      _
    $region3: #{tpu_custom_call.1} parent=1 // pred_check_branch
      %15 = sbr.rel (0) target = $region5
    $region4: #{tpu_custom_call.1} parent=1 // pred_region
      %s17 = ssub.s32 512, 512
      %18 = vsyncadd [#allocation3], %s17
      %s19 = sshll.u32 [#allocation2], 4
      %s20 = int_to_ptr.vmem [resolvable:$true] %s19
      %25 = dma.hbm_to_vmem [thread:$0]  %s0, 512, %s20, [#allocation3], 256, 256, 16
    $region5: #{tpu_custom_call.1} parent=1 // pred_fallthru
      _
    // Predicated region
    $region6: #{tpu_custom_call.1} parent=1 // pred_check
      _
    $region7: #{tpu_custom_call.1} parent=1 // pred_check_branch
      %27 = sbr.rel (0) target = $region9
    $region8: #{tpu_custom_call.1} parent=1 // pred_region
      _
    $region9: #{tpu_custom_call.1} parent=1 // pred_fallthru
      _
    // Predicated region
    $region10: #{tpu_custom_call.1} parent=1 // pred_check
      _
    $region11: #{tpu_custom_call.1} parent=1 // pred_check_branch
      %29 = sbr.rel (0) target = $region13
    $region12: #{tpu_custom_call.1} parent=1 // pred_region
      _
    $region13: #{tpu_custom_call.1} parent=1 // pred_fallthru
      _
    // Predicated region
    $region14: #{tpu_custom_call.1} parent=1 // pred_check
      _
    $region15: #{tpu_custom_call.1} parent=1 // pred_check_branch
      %31 = sbr.rel (0) target = $region17
    $region16: #{tpu_custom_call.1} parent=1 // pred_region
      _
    $region17: #{tpu_custom_call.1} parent=1 // pred_fallthru
      _
    // Predicated region
    $region18: #{tpu_custom_call.1} parent=1 // pred_check
      _
    $region19: #{tpu_custom_call.1} parent=1 // pred_check_branch
      %33 = sbr.rel (0) target = $region21
    $region20: #{tpu_custom_call.1} parent=1 // pred_region
      _
    $region21: #{tpu_custom_call.1} parent=1 // pred_fallthru
      _
    // Predicated region
    $region22: #{tpu_custom_call.1} parent=1 // pred_check
      _
    $region23: #{tpu_custom_call.1} parent=1 // pred_check_branch
      %35 = sbr.rel (0) target = $region25
    $region24: #{tpu_custom_call.1} parent=1 // pred_region
      %s37 = ssub.s32 4608, 4608
      %38 = vsyncadd [#allocation6], %s37
      %s39 = sshll.u32 [#allocation5], 4
      %s40 = int_to_ptr.vmem [resolvable:$true] %s39
      %45 = dma.hbm_to_vmem [thread:$0]  %s5, 4608, %s40, [#allocation6], 512, 512, 32
    $region25: #{tpu_custom_call.1} parent=1 // pred_fallthru
      _
    // Predicated region
    $region26: #{tpu_custom_call.1} parent=1 // pred_check
      _
    $region27: #{tpu_custom_call.1} parent=1 // pred_check_branch
      %47 = sbr.rel (0) target = $region29
    $region28: #{tpu_custom_call.1} parent=1 // pred_region
      %48 = dma.done [#allocation3], 512
    $region29: #{tpu_custom_call.1} parent=1 // pred_fallthru
      _
    // Predicated region
    $region30: #{tpu_custom_call.1} parent=1 // pred_check
      _
    $region31: #{tpu_custom_call.1} parent=1 // pred_check_branch
      %50 = sbr.rel (0) target = $region33
    $region32: #{tpu_custom_call.1} parent=1 // pred_region
      %51 = dma.done [#allocation6], 4608
    $region33: #{tpu_custom_call.1} parent=1 // pred_fallthru
      _
    %v52 = vld [vmem:[#allocation2] sm:$0xff]
    %v53 = vld [vmem:[#allocation2 + $0x8] sm:$0xff]
    %s54 = scalar_lea.vmem [#allocation2], 16
    %v55 = vld [vmem:[%s54] sm:$0xff]
    %v56 = vld [vmem:[%s54 + $0x8] sm:$0xff]
    %v57 = vld [vmem:[%s1] sm:$0xff]
    %58 = vrot.lane.b32.xlu0 %v52, 17
    %v59 = vpop.permute.xlu0 %58
    %60 = vrot.lane.b32.xlu0 %v53, 17
    %v61 = vpop.permute.xlu0 %60
    %62 = vrot.lane.b32.xlu0 %v55, 17
    %v63 = vpop.permute.xlu0 %62
    %64 = vrot.lane.b32.xlu0 %v56, 17
    %v65 = vpop.permute.xlu0 %64
    %v66 = vlaneseq
    %v67 = vand.u32 %v66, 127
    %vm68 = vcmp.lt.s32.totalorder %v67, 17
    %v69 = vsel %vm68, %v63, %v65
    %v70 = vsel %vm68, %v61, %v63
    %v71 = vsel %vm68, %v59, %v61
    %v72 = vsel %vm68, %v65, %v59
    %v73 = vld [vmem:[#allocation5] sm:$0xff]
    %v74 = vld [vmem:[#allocation5 + $0x8] sm:$0xff]
    %v75 = vld [vmem:[#allocation5 + $0x10] sm:$0xff]
    %v76 = vld [vmem:[#allocation5 + $0x18] sm:$0xff]
    %v77 = vmul.f32 %v72, %v73
    %v78 = vmul.f32 %v71, %v74
    %v79 = vmul.f32 %v70, %v75
    %v80 = vmul.f32 %v69, %v76
    %81 = vrot.lane.b32.xlu0 %v52, 16
    %v82 = vpop.permute.xlu0 %81
    %83 = vrot.lane.b32.xlu0 %v53, 16
    %v84 = vpop.permute.xlu0 %83
    %85 = vrot.lane.b32.xlu0 %v55, 16
    %v86 = vpop.permute.xlu0 %85
    %87 = vrot.lane.b32.xlu0 %v56, 16
    %v88 = vpop.permute.xlu0 %87
    %vm89 = vcmp.lt.s32.totalorder %v67, 16
    %v90 = vsel %vm89, %v86, %v88
    %v91 = vsel %vm89, %v84, %v86
    %v92 = vsel %vm89, %v82, %v84
    %v93 = vsel %vm89, %v88, %v82
    %s94 = scalar_lea.vmem [#allocation5], 32
    %v95 = vld [vmem:[%s94] sm:$0xff]
    %v96 = vld [vmem:[%s94 + $0x8] sm:$0xff]
    %v97 = vld [vmem:[%s94 + $0x10] sm:$0xff]
    %v98 = vld [vmem:[%s94 + $0x18] sm:$0xff]
    %v99 = vmul.f32 %v93, %v95
    %v100 = vmul.f32 %v92, %v96
    %v101 = vmul.f32 %v91, %v97
    %v102 = vmul.f32 %v90, %v98
    %103 = vrot.lane.b32.xlu0 %v52, 15
    %v104 = vpop.permute.xlu0 %103
    %105 = vrot.lane.b32.xlu0 %v53, 15
    %v106 = vpop.permute.xlu0 %105
    %107 = vrot.lane.b32.xlu0 %v55, 15
    %v108 = vpop.permute.xlu0 %107
    %109 = vrot.lane.b32.xlu0 %v56, 15
    %v110 = vpop.permute.xlu0 %109
    %vm111 = vcmp.lt.s32.totalorder %v67, 15
    %v112 = vsel %vm111, %v108, %v110
    %v113 = vsel %vm111, %v106, %v108
    %v114 = vsel %vm111, %v104, %v106
    %v115 = vsel %vm111, %v110, %v104
    %s116 = scalar_lea.vmem [#allocation5], 64
    %v117 = vld [vmem:[%s116] sm:$0xff]
    %v118 = vld [vmem:[%s116 + $0x8] sm:$0xff]
    %v119 = vld [vmem:[%s116 + $0x10] sm:$0xff]
    %v120 = vld [vmem:[%s116 + $0x18] sm:$0xff]
    %v121 = vmul.f32 %v115, %v117
    %v122 = vmul.f32 %v114, %v118
    %v123 = vmul.f32 %v113, %v119
    %v124 = vmul.f32 %v112, %v120
    %125 = vrot.lane.b32.xlu0 %v52, 1
    %v126 = vpop.permute.xlu0 %125
    %127 = vrot.lane.b32.xlu0 %v53, 1
    %v128 = vpop.permute.xlu0 %127
    %129 = vrot.lane.b32.xlu0 %v55, 1
    %v130 = vpop.permute.xlu0 %129
    %131 = vrot.lane.b32.xlu0 %v56, 1
    %v132 = vpop.permute.xlu0 %131
    %vm133 = vcmp.lt.s32.totalorder %v67, 1
    %v134 = vsel %vm133, %v130, %v132
    %v135 = vsel %vm133, %v128, %v130
    %v136 = vsel %vm133, %v126, %v128
    %v137 = vsel %vm133, %v132, %v126
    %s138 = scalar_lea.vmem [#allocation5], 96
    %v139 = vld [vmem:[%s138] sm:$0xff]
    %v140 = vld [vmem:[%s138 + $0x8] sm:$0xff]
    %v141 = vld [vmem:[%s138 + $0x10] sm:$0xff]
    %v142 = vld [vmem:[%s138 + $0x18] sm:$0xff]
    %v143 = vmul.f32 %v137, %v139
    %v144 = vmul.f32 %v136, %v140
    %v145 = vmul.f32 %v135, %v141
    %v146 = vmul.f32 %v134, %v142
    %147 = vrot.lane.b32.xlu0 %v52, 127
    %v148 = vpop.permute.xlu0 %147
    %149 = vrot.lane.b32.xlu0 %v53, 127
    %v150 = vpop.permute.xlu0 %149
    %151 = vrot.lane.b32.xlu0 %v55, 127
    %v152 = vpop.permute.xlu0 %151
    %153 = vrot.lane.b32.xlu0 %v56, 127
    %v154 = vpop.permute.xlu0 %153
    %vm155 = vcmp.lt.s32.totalorder %v67, 127
    %v156 = vsel %vm155, %v152, %v154
    %v157 = vsel %vm155, %v150, %v152
    %v158 = vsel %vm155, %v148, %v150
    %v159 = vsel %vm155, %v154, %v148
    %s160 = scalar_lea.vmem [#allocation5], 160
    %v161 = vld [vmem:[%s160] sm:$0xff]
    %v162 = vld [vmem:[%s160 + $0x8] sm:$0xff]
    %v163 = vld [vmem:[%s160 + $0x10] sm:$0xff]
    %v164 = vld [vmem:[%s160 + $0x18] sm:$0xff]
    %v165 = vmul.f32 %v158, %v161
    %v166 = vmul.f32 %v157, %v162
    %v167 = vmul.f32 %v156, %v163
    %v168 = vmul.f32 %v159, %v164
    %169 = vrot.lane.b32.xlu0 %v52, 113
    %v170 = vpop.permute.xlu0 %169
    %171 = vrot.lane.b32.xlu0 %v53, 113
    %v172 = vpop.permute.xlu0 %171
    %173 = vrot.lane.b32.xlu0 %v55, 113
    %v174 = vpop.permute.xlu0 %173
    %175 = vrot.lane.b32.xlu0 %v56, 113
    %v176 = vpop.permute.xlu0 %175
    %vm177 = vcmp.lt.s32.totalorder %v67, 113
    %v178 = vsel %vm177, %v174, %v176
    %v179 = vsel %vm177, %v172, %v174
    %v180 = vsel %vm177, %v170, %v172
    %v181 = vsel %vm177, %v176, %v170
    %s182 = scalar_lea.vmem [#allocation5], 192
    %v183 = vld [vmem:[%s182] sm:$0xff]
    %v184 = vld [vmem:[%s182 + $0x8] sm:$0xff]
    %v185 = vld [vmem:[%s182 + $0x10] sm:$0xff]
    %v186 = vld [vmem:[%s182 + $0x18] sm:$0xff]
    %v187 = vmul.f32 %v180, %v183
    %v188 = vmul.f32 %v179, %v184
    %v189 = vmul.f32 %v178, %v185
    %v190 = vmul.f32 %v181, %v186
    %191 = vrot.lane.b32.xlu0 %v52, 112
    %v192 = vpop.permute.xlu0 %191
    %193 = vrot.lane.b32.xlu0 %v53, 112
    %v194 = vpop.permute.xlu0 %193
    %195 = vrot.lane.b32.xlu0 %v55, 112
    %v196 = vpop.permute.xlu0 %195
    %197 = vrot.lane.b32.xlu0 %v56, 112
    %v198 = vpop.permute.xlu0 %197
    %vm199 = vcmp.lt.s32.totalorder %v67, 112
    %v200 = vsel %vm199, %v196, %v198
    %v201 = vsel %vm199, %v194, %v196
    %v202 = vsel %vm199, %v192, %v194
    %v203 = vsel %vm199, %v198, %v192
    %s204 = scalar_lea.vmem [#allocation5], 224
    %v205 = vld [vmem:[%s204] sm:$0xff]
    %v206 = vld [vmem:[%s204 + $0x8] sm:$0xff]
    %v207 = vld [vmem:[%s204 + $0x10] sm:$0xff]
    %v208 = vld [vmem:[%s204 + $0x18] sm:$0xff]
    %v209 = vmul.f32 %v202, %v205
    %v210 = vmul.f32 %v201, %v206
    %v211 = vmul.f32 %v200, %v207
    %v212 = vmul.f32 %v203, %v208
    %213 = vrot.lane.b32.xlu0 %v52, 111
    %v214 = vpop.permute.xlu0 %213
    %215 = vrot.lane.b32.xlu0 %v53, 111
    %v216 = vpop.permute.xlu0 %215
    %217 = vrot.lane.b32.xlu0 %v55, 111
    %v218 = vpop.permute.xlu0 %217
    %219 = vrot.lane.b32.xlu0 %v56, 111
    %v220 = vpop.permute.xlu0 %219
    %vm221 = vcmp.lt.s32.totalorder %v67, 111
    %v222 = vsel %vm221, %v218, %v220
    %v223 = vsel %vm221, %v216, %v218
    %v224 = vsel %vm221, %v214, %v216
    %v225 = vsel %vm221, %v220, %v214
    %s226 = scalar_lea.vmem [#allocation5], 256
    %v227 = vld [vmem:[%s226] sm:$0xff]
    %v228 = vld [vmem:[%s226 + $0x8] sm:$0xff]
    %v229 = vld [vmem:[%s226 + $0x10] sm:$0xff]
    %v230 = vld [vmem:[%s226 + $0x18] sm:$0xff]
    %v231 = vmul.f32 %v224, %v227
    %v232 = vmul.f32 %v223, %v228
    %v233 = vmul.f32 %v222, %v229
    %v234 = vmul.f32 %v225, %v230
    %v235 = vld [vmem:[%s2] sm:$0xff]
    %237 = vset.pattern.permute.xlu0 0
    %238 = vperm.xlu0 %237, %v235
    %v239 = vpop.permute.xlu0 %238
    %vm241 = vcmask 588800
    %v243 = vsel %vm241, %v57, 0
    %245 = vmatprep.subr.mxu0 %v78
    %246 = vmatpush1.msra.mxu0 %v77
    %247 = vmatprep.subr.mxu0 %v100
    %248 = vmatpush1.msra.mxu0 %v99
    %249 = vmatprep.subr.mxu0 %v122
    %250 = vmatpush1.msra.mxu0 %v121
    %251 = vmatprep.subr.mxu0 %v144
    %252 = vmatpush1.msra.mxu0 %v143
    %253 = vmatprep.subr.mxu0 %v53
    %254 = vmatpush1.msra.mxu0 %v52
    %255 = vmatprep.subr.mxu0 %v166
    %256 = vmatpush1.msra.mxu0 %v165
    %257 = vmatprep.subr.mxu0 %v188
    %258 = vmatpush1.msra.mxu0 %v187
    %259 = vmatprep.subr.mxu0 %v210
    %260 = vmatpush1.msra.mxu0 %v209
    %261 = vmatprep.subr.mxu0 %v232
    %262 = vmatpush1.msra.mxu0 %v231
    %263 = vmatprep.subr.mxu0 0.0
    %264 = vmatpush1.msra.mxu0 0.0
    %265 = vmatprep.subr.mxu0 0.0
    %266 = vmatpush1.msra.mxu0 0.0
    %267 = vmatprep.subr.mxu0 0.0
    %268 = vmatpush1.msra.mxu0 0.0
    %269 = vmatprep.subr.mxu0 0.0
    %270 = vmatpush1.msra.mxu0 0.0
    %271 = vmatprep.subr.mxu0 0.0
    %272 = vmatpush1.msra.mxu0 0.0
    %273 = vmatprep.subr.mxu0 0.0
    %274 = vmatpush1.msra.mxu0 0.0
    %275 = vmatprep.subr.mxu0 0.0
    %276 = vmatpush1.msra.mxu0 0.0
    %277 = vmatprep.subr.mxu0 0.0
    %278 = vmatpush1.msra.mxu0 0.0
    %279 = vmatprep.subr.mxu0 0.0
    %280 = vmatpush1.msra.mxu0 0.0
    %281 = vmatprep.subr.mxu0 0.0
    %282 = vmatpush1.msra.mxu0 0.0
    %283 = vmatprep.subr.mxu0 0.0
    %284 = vmatpush1.msra.mxu0 0.0
    %285 = vmatprep.subr.mxu0 0.0
    %286 = vmatpush1.msra.mxu0 0.0
    %287 = vmatprep.subr.mxu0 0.0
    %288 = vmatpush1.msra.mxu0 0.0
    %289 = vmatprep.subr.mxu0 0.0
    %290 = vmatpush1.msra.mxu0 0.0
    %291 = vmatprep.subr.mxu0 0.0
    %292 = vmatpush1.msra.mxu0 0.0
    %293 = vmatprep.subr.mxu0 0.0
    %294 = vmatpush1.msra.mxu0 0.0
    %295 = vmatprep.subr.mxu0 0.0
    %296 = vmatpush1.msra.mxu0 0.0
    %297 = vmatprep.subr.mxu0 0.0
    %298 = vmatpush1.msra.mxu0 0.0
    %299 = vmatprep.subr.mxu0 0.0
    %300 = vmatpush1.msra.mxu0 0.0
    %301 = vmatprep.subr.mxu0 0.0
    %302 = vmatpush1.msra.mxu0 0.0
    %303 = vmatprep.subr.mxu0 0.0
    %304 = vmatpush1.msra.mxu0 0.0
    %305 = vmatprep.subr.mxu0 0.0
    %306 = vmatpush1.msra.mxu0 0.0
    %307 = vmatprep.subr.mxu0 0.0
    %308 = vmatpush1.msra.mxu0 0.0
    %309 = vmatprep.mubr.f32.mxu0 0.0
    %310 = vmatmul.mubr.f32.gmra.mrb[0].mxu0 %v243
    %v311 = vpop.f32.mrb[0].mxu0
    %v312 = vadd.f32 %v239, %v311
    %v313 = vpop.f32.mrb[0].mxu0
    %v314 = vadd.f32 %v239, %v313
    %315 = vdwg.mxu0
    %316 = vmatprep.subr.mxu0 %v80
    %317 = vmatpush1.msra.mxu0 %v79
    %318 = vmatprep.subr.mxu0 %v102
    %319 = vmatpush1.msra.mxu0 %v101
    %320 = vmatprep.subr.mxu0 %v124
    %321 = vmatpush1.msra.mxu0 %v123
    %322 = vmatprep.subr.mxu0 %v146
    %323 = vmatpush1.msra.mxu0 %v145
    %324 = vmatprep.subr.mxu0 %v56
    %325 = vmatpush1.msra.mxu0 %v55
    %326 = vmatprep.subr.mxu0 %v168
    %327 = vmatpush1.msra.mxu0 %v167
    %328 = vmatprep.subr.mxu0 %v190
    %329 = vmatpush1.msra.mxu0 %v189
    %330 = vmatprep.subr.mxu0 %v212
    %331 = vmatpush1.msra.mxu0 %v211
    %332 = vmatprep.subr.mxu0 %v234
    %333 = vmatpush1.msra.mxu0 %v233
    %334 = vmatprep.subr.mxu0 0.0
    %335 = vmatpush1.msra.mxu0 0.0
    %336 = vmatprep.subr.mxu0 0.0
    %337 = vmatpush1.msra.mxu0 0.0
    %338 = vmatprep.subr.mxu0 0.0
    %339 = vmatpush1.msra.mxu0 0.0
    %340 = vmatprep.subr.mxu0 0.0
    %341 = vmatpush1.msra.mxu0 0.0
    %342 = vmatprep.subr.mxu0 0.0
    %343 = vmatpush1.msra.mxu0 0.0
    %344 = vmatprep.subr.mxu0 0.0
    %345 = vmatpush1.msra.mxu0 0.0
    %346 = vmatprep.subr.mxu0 0.0
    %347 = vmatpush1.msra.mxu0 0.0
    %348 = vmatprep.subr.mxu0 0.0
    %349 = vmatpush1.msra.mxu0 0.0
    %350 = vmatprep.subr.mxu0 0.0
    %351 = vmatpush1.msra.mxu0 0.0
    %352 = vmatprep.subr.mxu0 0.0
    %353 = vmatpush1.msra.mxu0 0.0
    %354 = vmatprep.subr.mxu0 0.0
    %355 = vmatpush1.msra.mxu0 0.0
    %356 = vmatprep.subr.mxu0 0.0
    %357 = vmatpush1.msra.mxu0 0.0
    %358 = vmatprep.subr.mxu0 0.0
    %359 = vmatpush1.msra.mxu0 0.0
    %360 = vmatprep.subr.mxu0 0.0
    %361 = vmatpush1.msra.mxu0 0.0
    %362 = vmatprep.subr.mxu0 0.0
    %363 = vmatpush1.msra.mxu0 0.0
    %364 = vmatprep.subr.mxu0 0.0
    %365 = vmatpush1.msra.mxu0 0.0
    %366 = vmatprep.subr.mxu0 0.0
    %367 = vmatpush1.msra.mxu0 0.0
    %368 = vmatprep.subr.mxu0 0.0
    %369 = vmatpush1.msra.mxu0 0.0
    %370 = vmatprep.subr.mxu0 0.0
    %371 = vmatpush1.msra.mxu0 0.0
    %372 = vmatprep.subr.mxu0 0.0
    %373 = vmatpush1.msra.mxu0 0.0
    %374 = vmatprep.subr.mxu0 0.0
    %375 = vmatpush1.msra.mxu0 0.0
    %376 = vmatprep.subr.mxu0 0.0
    %377 = vmatpush1.msra.mxu0 0.0
    %378 = vmatprep.subr.mxu0 0.0
    %379 = vmatpush1.msra.mxu0 0.0
    %380 = vmatprep.mubr.f32.mxu0 0.0
    %381 = vmatmul.mubr.f32.gmra.mrb[0].mxu0 %v243
    %v382 = vpop.f32.mrb[0].mxu0
    %v383 = vadd.f32 %v239, %v382
    %v384 = vpop.f32.mrb[0].mxu0
    %v385 = vadd.f32 %v239, %v384
    %386 = vdwg.mxu0
    %v387 = vmax.f32 %v312, 0.0
    %v388 = vmax.f32 %v314, 0.0
    %v389 = vmax.f32 %v383, 0.0
    %v390 = vmax.f32 %v385, 0.0
    %v391 = vld [vmem:[%s3] sm:$0xff]
    %392 = vrot.lane.b32.xlu0 %v387, 17
    %v393 = vpop.permute.xlu0 %392
    %394 = vrot.lane.b32.xlu0 %v388, 17
    %v395 = vpop.permute.xlu0 %394
    %396 = vrot.lane.b32.xlu0 %v389, 17
    %v397 = vpop.permute.xlu0 %396
    %398 = vrot.lane.b32.xlu0 %v390, 17
    %v399 = vpop.permute.xlu0 %398
    %v400 = vsel %vm68, %v397, %v399
    %v401 = vsel %vm68, %v395, %v397
    %v402 = vsel %vm68, %v393, %v395
    %v403 = vsel %vm68, %v399, %v393
    %v404 = vmul.f32 %v403, %v73
    %v405 = vmul.f32 %v402, %v74
    %v406 = vmul.f32 %v401, %v75
    %v407 = vmul.f32 %v400, %v76
    %408 = vrot.lane.b32.xlu0 %v387, 16
    %v409 = vpop.permute.xlu0 %408
    %410 = vrot.lane.b32.xlu0 %v388, 16
    %v411 = vpop.permute.xlu0 %410
    %412 = vrot.lane.b32.xlu0 %v389, 16
    %v413 = vpop.permute.xlu0 %412
    %414 = vrot.lane.b32.xlu0 %v390, 16
    %v415 = vpop.permute.xlu0 %414
    %v416 = vsel %vm89, %v413, %v415
    %v417 = vsel %vm89, %v411, %v413
    %v418 = vsel %vm89, %v409, %v411
    %v419 = vsel %vm89, %v415, %v409
    %v420 = vmul.f32 %v419, %v95
    %v421 = vmul.f32 %v418, %v96
    %v422 = vmul.f32 %v417, %v97
    %v423 = vmul.f32 %v416, %v98
    %424 = vrot.lane.b32.xlu0 %v387, 15
    %v425 = vpop.permute.xlu0 %424
    %426 = vrot.lane.b32.xlu0 %v388, 15
    %v427 = vpop.permute.xlu0 %426
    %428 = vrot.lane.b32.xlu0 %v389, 15
    %v429 = vpop.permute.xlu0 %428
    %430 = vrot.lane.b32.xlu0 %v390, 15
    %v431 = vpop.permute.xlu0 %430
    %v432 = vsel %vm111, %v429, %v431
    %v433 = vsel %vm111, %v427, %v429
    %v434 = vsel %vm111, %v425, %v427
    %v435 = vsel %vm111, %v431, %v425
    %v436 = vmul.f32 %v435, %v117
    %v437 = vmul.f32 %v434, %v118
    %v438 = vmul.f32 %v433, %v119
    %v439 = vmul.f32 %v432, %v120
    %440 = vrot.lane.b32.xlu0 %v387, 1
    %v441 = vpop.permute.xlu0 %440
    %442 = vrot.lane.b32.xlu0 %v388, 1
    %v443 = vpop.permute.xlu0 %442
    %444 = vrot.lane.b32.xlu0 %v389, 1
    %v445 = vpop.permute.xlu0 %444
    %446 = vrot.lane.b32.xlu0 %v390, 1
    %v447 = vpop.permute.xlu0 %446
    %v448 = vsel %vm133, %v445, %v447
    %v449 = vsel %vm133, %v443, %v445
    %v450 = vsel %vm133, %v441, %v443
    %v451 = vsel %vm133, %v447, %v441
    %v452 = vmul.f32 %v451, %v139
    %v453 = vmul.f32 %v450, %v140
    %v454 = vmul.f32 %v449, %v141
    %v455 = vmul.f32 %v448, %v142
    %456 = vrot.lane.b32.xlu0 %v387, 127
    %v457 = vpop.permute.xlu0 %456
    %458 = vrot.lane.b32.xlu0 %v388, 127
    %v459 = vpop.permute.xlu0 %458
    %460 = vrot.lane.b32.xlu0 %v389, 127
    %v461 = vpop.permute.xlu0 %460
    %462 = vrot.lane.b32.xlu0 %v390, 127
    %v463 = vpop.permute.xlu0 %462
    %v464 = vsel %vm155, %v461, %v463
    %v465 = vsel %vm155, %v459, %v461
    %v466 = vsel %vm155, %v457, %v459
    %v467 = vsel %vm155, %v463, %v457
    %v468 = vmul.f32 %v466, %v161
    %v469 = vmul.f32 %v465, %v162
    %v470 = vmul.f32 %v464, %v163
    %v471 = vmul.f32 %v467, %v164
    %472 = vrot.lane.b32.xlu0 %v387, 113
    %v473 = vpop.permute.xlu0 %472
    %474 = vrot.lane.b32.xlu0 %v388, 113
    %v475 = vpop.permute.xlu0 %474
    %476 = vrot.lane.b32.xlu0 %v389, 113
    %v477 = vpop.permute.xlu0 %476
    %478 = vrot.lane.b32.xlu0 %v390, 113
    %v479 = vpop.permute.xlu0 %478
    %v480 = vsel %vm177, %v477, %v479
    %v481 = vsel %vm177, %v475, %v477
    %v482 = vsel %vm177, %v473, %v475
    %v483 = vsel %vm177, %v479, %v473
    %v484 = vmul.f32 %v482, %v183
    %v485 = vmul.f32 %v481, %v184
    %v486 = vmul.f32 %v480, %v185
    %v487 = vmul.f32 %v483, %v186
    %488 = vrot.lane.b32.xlu0 %v387, 112
    %v489 = vpop.permute.xlu0 %488
    %490 = vrot.lane.b32.xlu0 %v388, 112
    %v491 = vpop.permute.xlu0 %490
    %492 = vrot.lane.b32.xlu0 %v389, 112
    %v493 = vpop.permute.xlu0 %492
    %494 = vrot.lane.b32.xlu0 %v390, 112
    %v495 = vpop.permute.xlu0 %494
    %v496 = vsel %vm199, %v493, %v495
    %v497 = vsel %vm199, %v491, %v493
    %v498 = vsel %vm199, %v489, %v491
    %v499 = vsel %vm199, %v495, %v489
    %v500 = vmul.f32 %v498, %v205
    %v501 = vmul.f32 %v497, %v206
    %v502 = vmul.f32 %v496, %v207
    %v503 = vmul.f32 %v499, %v208
    %504 = vrot.lane.b32.xlu0 %v387, 111
    %v505 = vpop.permute.xlu0 %504
    %506 = vrot.lane.b32.xlu0 %v388, 111
    %v507 = vpop.permute.xlu0 %506
    %508 = vrot.lane.b32.xlu0 %v389, 111
    %v509 = vpop.permute.xlu0 %508
    %510 = vrot.lane.b32.xlu0 %v390, 111
    %v511 = vpop.permute.xlu0 %510
    %v512 = vsel %vm221, %v509, %v511
    %v513 = vsel %vm221, %v507, %v509
    %v514 = vsel %vm221, %v505, %v507
    %v515 = vsel %vm221, %v511, %v505
    %v516 = vmul.f32 %v514, %v227
    %v517 = vmul.f32 %v513, %v228
    %v518 = vmul.f32 %v512, %v229
    %v519 = vmul.f32 %v515, %v230
    %v520 = vld [vmem:[%s4] sm:$0xff]
    %522 = vset.pattern.permute.xlu0 0
    %523 = vperm.xlu0 %522, %v520
    %v524 = vpop.permute.xlu0 %523
    %v527 = vsel %vm241, %v391, 0
    %529 = vmatprep.subr.mxu0 %v405
    %530 = vmatpush1.msra.mxu0 %v404
    %531 = vmatprep.subr.mxu0 %v421
    %532 = vmatpush1.msra.mxu0 %v420
    %533 = vmatprep.subr.mxu0 %v437
    %534 = vmatpush1.msra.mxu0 %v436
    %535 = vmatprep.subr.mxu0 %v453
    %536 = vmatpush1.msra.mxu0 %v452
    %537 = vmatprep.subr.mxu0 %v388
    %538 = vmatpush1.msra.mxu0 %v387
    %539 = vmatprep.subr.mxu0 %v469
    %540 = vmatpush1.msra.mxu0 %v468
    %541 = vmatprep.subr.mxu0 %v485
    %542 = vmatpush1.msra.mxu0 %v484
    %543 = vmatprep.subr.mxu0 %v501
    %544 = vmatpush1.msra.mxu0 %v500
    %545 = vmatprep.subr.mxu0 %v517
    %546 = vmatpush1.msra.mxu0 %v516
    %547 = vmatprep.subr.mxu0 0.0
    %548 = vmatpush1.msra.mxu0 0.0
    %549 = vmatprep.subr.mxu0 0.0
    %550 = vmatpush1.msra.mxu0 0.0
    %551 = vmatprep.subr.mxu0 0.0
    %552 = vmatpush1.msra.mxu0 0.0
    %553 = vmatprep.subr.mxu0 0.0
    %554 = vmatpush1.msra.mxu0 0.0
    %555 = vmatprep.subr.mxu0 0.0
    %556 = vmatpush1.msra.mxu0 0.0
    %557 = vmatprep.subr.mxu0 0.0
    %558 = vmatpush1.msra.mxu0 0.0
    %559 = vmatprep.subr.mxu0 0.0
    %560 = vmatpush1.msra.mxu0 0.0
    %561 = vmatprep.subr.mxu0 0.0
    %562 = vmatpush1.msra.mxu0 0.0
    %563 = vmatprep.subr.mxu0 0.0
    %564 = vmatpush1.msra.mxu0 0.0
    %565 = vmatprep.subr.mxu0 0.0
    %566 = vmatpush1.msra.mxu0 0.0
    %567 = vmatprep.subr.mxu0 0.0
    %568 = vmatpush1.msra.mxu0 0.0
    %569 = vmatprep.subr.mxu0 0.0
    %570 = vmatpush1.msra.mxu0 0.0
    %571 = vmatprep.subr.mxu0 0.0
    %572 = vmatpush1.msra.mxu0 0.0
    %573 = vmatprep.subr.mxu0 0.0
    %574 = vmatpush1.msra.mxu0 0.0
    %575 = vmatprep.subr.mxu0 0.0
    %576 = vmatpush1.msra.mxu0 0.0
    %577 = vmatprep.subr.mxu0 0.0
    %578 = vmatpush1.msra.mxu0 0.0
    %579 = vmatprep.subr.mxu0 0.0
    %580 = vmatpush1.msra.mxu0 0.0
    %581 = vmatprep.subr.mxu0 0.0
    %582 = vmatpush1.msra.mxu0 0.0
    %583 = vmatprep.subr.mxu0 0.0
    %584 = vmatpush1.msra.mxu0 0.0
    %585 = vmatprep.subr.mxu0 0.0
    %586 = vmatpush1.msra.mxu0 0.0
    %587 = vmatprep.subr.mxu0 0.0
    %588 = vmatpush1.msra.mxu0 0.0
    %589 = vmatprep.subr.mxu0 0.0
    %590 = vmatpush1.msra.mxu0 0.0
    %591 = vmatprep.subr.mxu0 0.0
    %592 = vmatpush1.msra.mxu0 0.0
    %593 = vmatprep.mubr.f32.mxu0 0.0
    %594 = vmatmul.mubr.f32.gmra.mrb[0].mxu0 %v527
    %v595 = vpop.f32.mrb[0].mxu0
    %v596 = vadd.f32 %v524, %v595
    %v597 = vpop.f32.mrb[0].mxu0
    %v598 = vadd.f32 %v524, %v597
    %599 = vdwg.mxu0
    %600 = vmatprep.subr.mxu0 %v407
    %601 = vmatpush1.msra.mxu0 %v406
    %602 = vmatprep.subr.mxu0 %v423
    %603 = vmatpush1.msra.mxu0 %v422
    %604 = vmatprep.subr.mxu0 %v439
    %605 = vmatpush1.msra.mxu0 %v438
    %606 = vmatprep.subr.mxu0 %v455
    %607 = vmatpush1.msra.mxu0 %v454
    %608 = vmatprep.subr.mxu0 %v390
    %609 = vmatpush1.msra.mxu0 %v389
    %610 = vmatprep.subr.mxu0 %v471
    %611 = vmatpush1.msra.mxu0 %v470
    %612 = vmatprep.subr.mxu0 %v487
    %613 = vmatpush1.msra.mxu0 %v486
    %614 = vmatprep.subr.mxu0 %v503
    %615 = vmatpush1.msra.mxu0 %v502
    %616 = vmatprep.subr.mxu0 %v519
    %617 = vmatpush1.msra.mxu0 %v518
    %618 = vmatprep.subr.mxu0 0.0
    %619 = vmatpush1.msra.mxu0 0.0
    %620 = vmatprep.subr.mxu0 0.0
    %621 = vmatpush1.msra.mxu0 0.0
    %622 = vmatprep.subr.mxu0 0.0
    %623 = vmatpush1.msra.mxu0 0.0
    %624 = vmatprep.subr.mxu0 0.0
    %625 = vmatpush1.msra.mxu0 0.0
    %626 = vmatprep.subr.mxu0 0.0
    %627 = vmatpush1.msra.mxu0 0.0
    %628 = vmatprep.subr.mxu0 0.0
    %629 = vmatpush1.msra.mxu0 0.0
    %630 = vmatprep.subr.mxu0 0.0
    %631 = vmatpush1.msra.mxu0 0.0
    %632 = vmatprep.subr.mxu0 0.0
    %633 = vmatpush1.msra.mxu0 0.0
    %634 = vmatprep.subr.mxu0 0.0
    %635 = vmatpush1.msra.mxu0 0.0
    %636 = vmatprep.subr.mxu0 0.0
    %637 = vmatpush1.msra.mxu0 0.0
    %638 = vmatprep.subr.mxu0 0.0
    %639 = vmatpush1.msra.mxu0 0.0
    %640 = vmatprep.subr.mxu0 0.0
    %641 = vmatpush1.msra.mxu0 0.0
    %642 = vmatprep.subr.mxu0 0.0
    %643 = vmatpush1.msra.mxu0 0.0
    %644 = vmatprep.subr.mxu0 0.0
    %645 = vmatpush1.msra.mxu0 0.0
    %646 = vmatprep.subr.mxu0 0.0
    %647 = vmatpush1.msra.mxu0 0.0
    %648 = vmatprep.subr.mxu0 0.0
    %649 = vmatpush1.msra.mxu0 0.0
    %650 = vmatprep.subr.mxu0 0.0
    %651 = vmatpush1.msra.mxu0 0.0
    %652 = vmatprep.subr.mxu0 0.0
    %653 = vmatpush1.msra.mxu0 0.0
    %654 = vmatprep.subr.mxu0 0.0
    %655 = vmatpush1.msra.mxu0 0.0
    %656 = vmatprep.subr.mxu0 0.0
    %657 = vmatpush1.msra.mxu0 0.0
    %658 = vmatprep.subr.mxu0 0.0
    %659 = vmatpush1.msra.mxu0 0.0
    %660 = vmatprep.subr.mxu0 0.0
    %661 = vmatpush1.msra.mxu0 0.0
    %662 = vmatprep.subr.mxu0 0.0
    %663 = vmatpush1.msra.mxu0 0.0
    %664 = vmatprep.mubr.f32.mxu0 0.0
    %665 = vmatmul.mubr.f32.gmra.mrb[0].mxu0 %v527
    %v666 = vpop.f32.mrb[0].mxu0
    %v667 = vadd.f32 %v524, %v666
    %v668 = vpop.f32.mrb[0].mxu0
    %v669 = vadd.f32 %v524, %v668
    %670 = vdwg.mxu0
    %v671 = vmax.f32 %v596, 0.0
    %v672 = vmax.f32 %v598, 0.0
    %v673 = vmax.f32 %v667, 0.0
    %v674 = vmax.f32 %v669, 0.0
    %v675 = vadd.f32 %v671, %v52
    %v676 = vadd.f32 %v672, %v53
    %v677 = vadd.f32 %v673, %v55
    %v678 = vadd.f32 %v674, %v56
    %679 = vst [vmem:[#allocation7] sm:$0xff] %v675
    %680 = vst [vmem:[#allocation7 + $0x8] sm:$0xff] %v676
    %s681 = scalar_lea.vmem [#allocation7], 16
    %682 = vst [vmem:[%s681] sm:$0xff] %v677
    %683 = vst [vmem:[%s681 + $0x8] sm:$0xff] %v678
    // Predicated region
    $region34: #{tpu_custom_call.1} parent=1 // pred_check
      _
    $region35: #{tpu_custom_call.1} parent=1 // pred_check_branch
      %685 = sbr.rel (0) target = $region37
    $region36: #{tpu_custom_call.1} parent=1 // pred_region
      %s687 = ssub.s32 512, 512
      %688 = vsyncadd [#allocation4], %s687
      %s689 = sshll.u32 [#allocation7], 4
      %s690 = int_to_ptr.vmem [resolvable:$true] %s689
      %695 = dma.vmem_to_hbm [thread:$0]  %s690, 512, %s6, [#allocation4], 256, 256, 16
    $region37: #{tpu_custom_call.1} parent=1 // pred_fallthru
      _
    // Predicated region
    $region38: #{tpu_custom_call.1} parent=1 // pred_check
      _
    $region39: #{tpu_custom_call.1} parent=1 // pred_check_branch
      %697 = sbr.rel (0) target = $region41
    $region40: #{tpu_custom_call.1} parent=1 // pred_region
      %698 = dma.done [#allocation4], 512
    $region41: #{tpu_custom_call.1} parent=1 // pred_fallthru
      _
    %699 = vsyncpa [#allocation3], 1
    %700 = vsyncpa [#allocation6], 1
    %701 = vsyncpa [#allocation4], 1

</llo_original>
